<compile_context>
chip_gen: v5e
topology: v5e:2x2
jax: 0.10.0
libtpu: 0.0.40
codegen_flags: <defaults>
</compile_context>

<pallas_src>
import functools

import jax
import jax.numpy as jnp
from jax.experimental import pallas as pl
from jax.experimental.pallas import tpu as pltpu


def _round_up(v, m):
    return ((v + m - 1) // m) * m


def mlp_kernel(x_ref, w1_ref, b1_ref, w2_ref, b2_ref, *rest, training: bool):
    if training:
        mask_ref, o_ref = rest
    else:
        (o_ref,) = rest

    # lay1: bf16 MXU matmul with f32 accumulation, then bias + ReLU on the VPU.
    h1 = jnp.dot(x_ref[...], w1_ref[...], preferred_element_type=jnp.float32)
    h1 = jnp.maximum(h1 + b1_ref[...], 0.0)

    if training:
        # Inverted dropout, p = 0.5: mask holds 0.0 (dropped) or 2.0 (kept * 1/(1-p)).
        h1 = h1 * mask_ref[...]

    # lay2: cast activations to bf16 for the MXU, accumulate in f32.
    h2 = jnp.dot(h1.astype(w2_ref.dtype), w2_ref[...],
                 preferred_element_type=jnp.float32)
    o_ref[...] = (h2 + b2_ref[...]).astype(o_ref.dtype)


def net_forward(x, w1, b1, w2, b2, key, *, training=True, tile_m=512):
    """Forward pass of Net.

    w1: (num_inputs, H)   b1: (1, H) or (H,)
    w2: (H, num_outputs)  b2: (1, num_outputs) or (num_outputs,)
    key: jax.random key used for the dropout mask when training=True.
    """
    num_inputs, num_hidden = w1.shape
    num_outputs = w2.shape[1]

    x2 = x.reshape(-1, num_inputs)
    m = x2.shape[0]

    # MXU / lane-friendly padded dims; M tile multiple of 8 (f32 sublane).
    k_pad = _round_up(max(num_inputs, 1), 128)
    h_pad = _round_up(max(num_hidden, 1), 128)
    n_pad = _round_up(max(num_outputs, 1), 128)
    tm = min(tile_m, _round_up(m, 8))
    m_pad = _round_up(m, tm)

    # Zero-pad operands. Matmul operands in bf16, biases in f32.
    xp = jnp.zeros((m_pad, k_pad), jnp.bfloat16).at[:m, :num_inputs].set(
        x2.astype(jnp.bfloat16))
    w1p = jnp.zeros((k_pad, h_pad), jnp.bfloat16).at[:num_inputs, :num_hidden].set(
        w1.astype(jnp.bfloat16))
    b1p = jnp.zeros((1, h_pad), jnp.float32).at[:, :num_hidden].set(
        b1.reshape(1, -1).astype(jnp.float32))
    w2p = jnp.zeros((h_pad, n_pad), jnp.bfloat16).at[:num_hidden, :num_outputs].set(
        w2.astype(jnp.bfloat16))
    b2p = jnp.zeros((1, n_pad), jnp.float32).at[:, :num_outputs].set(
        b2.reshape(1, -1).astype(jnp.float32))

    grid = (m_pad // tm,)

    in_specs = [
        pl.BlockSpec((tm, k_pad), lambda i: (i, 0)),     # x tile (pipelined)
        pl.BlockSpec((k_pad, h_pad), lambda i: (0, 0)),  # w1 resident
        pl.BlockSpec((1, h_pad), lambda i: (0, 0)),      # b1 resident
        pl.BlockSpec((h_pad, n_pad), lambda i: (0, 0)),  # w2 resident
        pl.BlockSpec((1, n_pad), lambda i: (0, 0)),      # b2 resident
    ]
    args = [xp, w1p, b1p, w2p, b2p]

    if training:
        # Host-generated Bernoulli(0.5) keep mask with survivor scale folded in;
        # streamed per M-tile so each tile gets independent randomness.
        keep = jax.random.bernoulli(key, 0.5, (m_pad, h_pad))
        mask = keep.astype(jnp.float32) * 2.0
        in_specs.append(pl.BlockSpec((tm, h_pad), lambda i: (i, 0)))
        args.append(mask)

    flops = 2 * m_pad * (k_pad * h_pad + h_pad * n_pad)
    bytes_accessed = int(sum(a.size * a.dtype.itemsize for a in args)
                         + m_pad * n_pad * 4)

    out = pl.pallas_call(
        functools.partial(mlp_kernel, training=training),
        grid=grid,
        in_specs=in_specs,
        out_specs=pl.BlockSpec((tm, n_pad), lambda i: (i, 0)),
        out_shape=jax.ShapeDtypeStruct((m_pad, n_pad), jnp.float32),
        compiler_params=pltpu.CompilerParams(
            dimension_semantics=("parallel",),
            vmem_limit_bytes=32 * 1024 * 1024,
        ),
        cost_estimate=pl.CostEstimate(
            flops=flops, transcendentals=0, bytes_accessed=bytes_accessed),
    )(*args)

    # Strip the M / output-feature padding.
    return out[:m, :num_outputs]


def init_params(key, num_inputs, num_outputs, num_hiddens1):
    k1, k2, k3, k4 = jax.random.split(key, 4)
    # Deterministic synthetic init (shapes match nn.Linear; values are synthetic).
    w1 = jax.random.normal(k1, (num_inputs, num_hiddens1), jnp.float32) * 0.05
    b1 = jax.random.normal(k2, (1, num_hiddens1), jnp.float32) * 0.05
    w2 = jax.random.normal(k3, (num_hiddens1, num_outputs), jnp.float32) * 0.05
    b2 = jax.random.normal(k4, (1, num_outputs), jnp.float32) * 0.05
    return w1, b1, w2, b2


if __name__ == "__main__":
    num_inputs, num_outputs, num_hiddens1 = 32, 16, 64

    key = jax.random.PRNGKey(0)
    kx, kp, kd = jax.random.split(key, 3)

    # Arbitrary leading dims; forward flattens to (-1, num_inputs) = (4, 32).
    x = jax.random.normal(kx, (2, 4, 16), jnp.float32)
    w1, b1, w2, b2 = init_params(kp, num_inputs, num_outputs, num_hiddens1)

    # Training path (with dropout).
    out = jax.block_until_ready(net_forward(x, w1, b1, w2, b2, kd, training=True))
    assert out.shape == (4, num_outputs)

    # Eval path (no dropout) + numeric check against a pure-JAX reference.
    out_eval = jax.block_until_ready(
        net_forward(x, w1, b1, w2, b2, kd, training=False))
    assert out_eval.shape == (4, num_outputs)

    ref = (jnp.maximum(x.reshape(-1, num_inputs) @ w1 + b1.reshape(1, -1), 0.0)
           @ w2 + b2.reshape(1, -1))
    assert jnp.allclose(out_eval, ref, atol=2e-2, rtol=2e-2), "eval-path mismatch"

    print("KERNEL_OK")
</pallas_src>

<mosaic_0001>
module attributes {stable_mosaic.version = 11 : i64} {
  func.func @mlp_kernel(%arg0: i32, %arg1: memref<8x128xbf16, #tpu.memory_space<vmem>>, %arg2: memref<128x128xbf16, #tpu.memory_space<vmem>>, %arg3: memref<1x128xf32, #tpu.memory_space<vmem>>, %arg4: memref<128x128xbf16, #tpu.memory_space<vmem>>, %arg5: memref<1x128xf32, #tpu.memory_space<vmem>>, %arg6: memref<8x128xf32, #tpu.memory_space<vmem>>, %arg7: memref<8x128xf32, #tpu.memory_space<vmem>>) attributes {dimension_semantics = [#tpu.dimension_semantics<parallel>], iteration_bounds = array<i64: 1>, scalar_prefetch = 0 : i64, scratch_operands = 0 : i64, tpu.core_type = #tpu.core_type<tc>, window_params = [{transform_indices = @transform_0, window_bounds = array<i64: 8, 128>}, {pipeline_mode = #tpu.pipeline_mode<synchronous>, transform_indices = @transform_1, window_bounds = array<i64: 128, 128>}, {pipeline_mode = #tpu.pipeline_mode<synchronous>, transform_indices = @transform_2, window_bounds = array<i64: 1, 128>}, {pipeline_mode = #tpu.pipeline_mode<synchronous>, transform_indices = @transform_3, window_bounds = array<i64: 128, 128>}, {pipeline_mode = #tpu.pipeline_mode<synchronous>, transform_indices = @transform_4, window_bounds = array<i64: 1, 128>}, {transform_indices = @transform_5, window_bounds = array<i64: 8, 128>}, {transform_indices = @transform_6, window_bounds = array<i64: 8, 128>}]} {
    %c0 = arith.constant 0 : index
    %c0_0 = arith.constant 0 : index
    %0 = vector.load %arg1[%c0, %c0_0] : memref<8x128xbf16, #tpu.memory_space<vmem>>, vector<8x128xbf16>
    %c0_1 = arith.constant 0 : index
    %c0_2 = arith.constant 0 : index
    %1 = vector.load %arg2[%c0_1, %c0_2] : memref<128x128xbf16, #tpu.memory_space<vmem>>, vector<128x128xbf16>
    %cst = arith.constant dense<0.000000e+00> : vector<8x128xf32>
    %2 = tpu.matmul %0, %1, %cst {dimension_numbers = #tpu.dot_dimension_numbers<[1], [0], [0], [1], [0, 0, 1, 1], [], []>} : vector<8x128xbf16>, vector<128x128xbf16>, vector<8x128xf32> -> vector<8x128xf32>
    %c0_3 = arith.constant 0 : index
    %c0_4 = arith.constant 0 : index
    %3 = vector.load %arg3[%c0_3, %c0_4] : memref<1x128xf32, #tpu.memory_space<vmem>>, vector<1x128xf32>
    %4 = vector.broadcast %3 : vector<1x128xf32> to vector<8x128xf32>
    %5 = arith.addf %2, %4 : vector<8x128xf32>
    %cst_5 = arith.constant 0.000000e+00 : f32
    %6 = vector.broadcast %cst_5 : f32 to vector<8x128xf32>
    %7 = arith.maximumf %5, %6 : vector<8x128xf32>
    %c0_6 = arith.constant 0 : index
    %c0_7 = arith.constant 0 : index
    %8 = vector.load %arg6[%c0_6, %c0_7] : memref<8x128xf32, #tpu.memory_space<vmem>>, vector<8x128xf32>
    %9 = arith.mulf %7, %8 : vector<8x128xf32>
    %10 = arith.truncf %9 : vector<8x128xf32> to vector<8x128xbf16>
    %c0_8 = arith.constant 0 : index
    %c0_9 = arith.constant 0 : index
    %11 = vector.load %arg4[%c0_8, %c0_9] : memref<128x128xbf16, #tpu.memory_space<vmem>>, vector<128x128xbf16>
    %cst_10 = arith.constant dense<0.000000e+00> : vector<8x128xf32>
    %12 = tpu.matmul %10, %11, %cst_10 {dimension_numbers = #tpu.dot_dimension_numbers<[1], [0], [0], [1], [0, 0, 1, 1], [], []>} : vector<8x128xbf16>, vector<128x128xbf16>, vector<8x128xf32> -> vector<8x128xf32>
    %c0_11 = arith.constant 0 : index
    %c0_12 = arith.constant 0 : index
    %13 = vector.load %arg5[%c0_11, %c0_12] : memref<1x128xf32, #tpu.memory_space<vmem>>, vector<1x128xf32>
    %14 = vector.broadcast %13 : vector<1x128xf32> to vector<8x128xf32>
    %15 = arith.addf %12, %14 : vector<8x128xf32>
    %c0_13 = arith.constant 0 : index
    %c0_14 = arith.constant 0 : index
    %16 = vector.load %arg7[%c0_13, %c0_14] : memref<8x128xf32, #tpu.memory_space<vmem>>, vector<8x128xf32>
    tpu.vector_store %arg7[%c0_13, %c0_14], %15 {strides = array<i32>} : memref<8x128xf32, #tpu.memory_space<vmem>>, vector<8x128xf32>,
    return
  }
  func.func @transform_0(%arg0: i32) -> (i32, i32) {
    %c0_i32 = arith.constant 0 : i32
    %c0_i32_0 = arith.constant 0 : i32
    return %arg0, %c0_i32 : i32, i32
  }
  func.func @transform_1(%arg0: i32) -> (i32, i32) {
    %c0_i32 = arith.constant 0 : i32
    %c0_i32_0 = arith.constant 0 : i32
    %c0_i32_1 = arith.constant 0 : i32
    return %c0_i32, %c0_i32_0 : i32, i32
  }
  func.func @transform_2(%arg0: i32) -> (i32, i32) {
    %c0_i32 = arith.constant 0 : i32
    %c0_i32_0 = arith.constant 0 : i32
    %c0_i32_1 = arith.constant 0 : i32
    return %c0_i32, %c0_i32_0 : i32, i32
  }
  func.func @transform_3(%arg0: i32) -> (i32, i32) {
    %c0_i32 = arith.constant 0 : i32
    %c0_i32_0 = arith.constant 0 : i32
    %c0_i32_1 = arith.constant 0 : i32
    return %c0_i32, %c0_i32_0 : i32, i32
  }
  func.func @transform_4(%arg0: i32) -> (i32, i32) {
    %c0_i32 = arith.constant 0 : i32
    %c0_i32_0 = arith.constant 0 : i32
    %c0_i32_1 = arith.constant 0 : i32
    return %c0_i32, %c0_i32_0 : i32, i32
  }
  func.func @transform_5(%arg0: i32) -> (i32, i32) {
    %c0_i32 = arith.constant 0 : i32
    %c0_i32_0 = arith.constant 0 : i32
    return %arg0, %c0_i32 : i32, i32
  }
  func.func @transform_6(%arg0: i32) -> (i32, i32) {
    %c0_i32 = arith.constant 0 : i32
    %c0_i32_0 = arith.constant 0 : i32
    return %arg0, %c0_i32 : i32, i32
  }
}

</mosaic_0001>

<llo_original>
// kernel: tpu_custom_call.1
$region0: #{tpu_custom_call.1}
  #allocation0 [shape = 'u32[]', space=smem, size = 0x4, offset = 0x4, fixed_abs, tag = 'smem constant byte address 0x4 - core index']
  #allocation1 [shape = 'u32[72,128]{1,0:T(1,128)}', space=vmem, size = 0x9000, scoped, tag = 'internal scratch']
  %s0 = inlined_call_operand.hbm [shape: bf16[8,128], index: 0, kind: input, shape index: {}]
  %s1 = inlined_call_operand.hbm [shape: bf16[128,128], index: 1, kind: input, shape index: {}]
  %s2 = inlined_call_operand.vmem [shape: f32[1,128], index: 2, kind: input, shape index: {}]
  %s3 = inlined_call_operand.hbm [shape: bf16[128,128], index: 3, kind: input, shape index: {}]
  %s4 = inlined_call_operand.vmem [shape: f32[1,128], index: 4, kind: input, shape index: {}]
  %s5 = inlined_call_operand.hbm [shape: f32[8,128], index: 5, kind: input, shape index: {}]
  %s6 = inlined_call_operand.hbm [shape: f32[8,128], index: 6, kind: output, shape index: {}]
  %s7 = sld [smem:[#allocation0]]
  $region50: #{tpu_custom_call.1} parent=0
    _
  %s9 = ssub.s32 1, %s7
  %s10 = scalar_select 0, %s9, %s7
  $region1: #{tpu_custom_call.1} parent=0
    #allocation2 [shape = 'u8[2048]{0}', space=vmem, size = 0x800, scoped, tag = 'input window, operand 0, single buffered']
    #allocation3 [shape = 's32[1]{0}', space=sflag, size = 0x4, scoped, tag = 'scoped memory for tpu_custom_call.1']
    #allocation4 [shape = 's32[1]{0}', space=sflag, size = 0x4, scoped, tag = 'scoped memory for tpu_custom_call.1']
    #allocation5 [shape = 'u8[32768]{0}', space=vmem, size = 0x8000, scoped, tag = 'input window, operand 1, single buffered']
    #allocation6 [shape = 's32[1]{0}', space=sflag, size = 0x4, scoped, tag = 'scoped memory for tpu_custom_call.1']
    #allocation7 [shape = 'u8[32768]{0}', space=vmem, size = 0x8000, scoped, tag = 'input window, operand 3, single buffered']
    #allocation8 [shape = 'u8[4096]{0}', space=vmem, size = 0x1000, scoped, tag = 'input window, operand 5, single buffered']
    #allocation9 [shape = 's32[1]{0}', space=sflag, size = 0x4, scoped, tag = 'scoped memory for tpu_custom_call.1']
    #allocation10 [shape = 'u8[4096]{0}', space=vmem, size = 0x1000, scoped, tag = 'output window, operand 0, single buffered']
    %11 = vsyncpa [#allocation3], 0
    %12 = vsyncpa [#allocation6], 0
    %13 = vsyncpa [#allocation9], 0
    %14 = vsyncpa [#allocation4], 0
    // Predicated region
    $region2: #{tpu_custom_call.1} parent=1 // pred_check
      _
    $region3: #{tpu_custom_call.1} parent=1 // pred_check_branch
      %16 = sbr.rel (0) target = $region5
    $region4: #{tpu_custom_call.1} parent=1 // pred_region
      %18 = vsyncadd [#allocation3], 0
      %s20 = sshll.u32 %s0, 4
      %s21 = int_to_ptr.hbm [resolvable:$true] %s20
      %s22 = sshll.u32 [#allocation2], 4
      %s23 = int_to_ptr.vmem [resolvable:$true] %s22
      %25 = dma.hbm_to_vmem [thread:$0]  %s21, 64, %s23, [#allocation3]
    $region5: #{tpu_custom_call.1} parent=1 // pred_fallthru
      _
    // Predicated region
    $region6: #{tpu_custom_call.1} parent=1 // pred_check
      _
    $region7: #{tpu_custom_call.1} parent=1 // pred_check_branch
      %27 = sbr.rel (0) target = $region9
    $region8: #{tpu_custom_call.1} parent=1 // pred_region
      %29 = vsyncadd [#allocation6], 0
      %s30 = sshll.u32 %s1, 4
      %s31 = int_to_ptr.hbm [resolvable:$true] %s30
      %s32 = sshll.u32 [#allocation5], 4
      %s33 = int_to_ptr.vmem [resolvable:$true] %s32
      %38 = dma.hbm_to_vmem [thread:$0]  %s31, 1024, %s33, [#allocation6], 64, 64, 4
    $region9: #{tpu_custom_call.1} parent=1 // pred_fallthru
      _
    // Predicated region
    $region10: #{tpu_custom_call.1} parent=1 // pred_check
      _
    $region11: #{tpu_custom_call.1} parent=1 // pred_check_branch
      %40 = sbr.rel (0) target = $region13
    $region12: #{tpu_custom_call.1} parent=1 // pred_region
      _
    $region13: #{tpu_custom_call.1} parent=1 // pred_fallthru
      _
    // Predicated region
    $region14: #{tpu_custom_call.1} parent=1 // pred_check
      _
    $region15: #{tpu_custom_call.1} parent=1 // pred_check_branch
      %42 = sbr.rel (0) target = $region17
    $region16: #{tpu_custom_call.1} parent=1 // pred_region
      %44 = vsyncadd [#allocation6], 0
      %s45 = sshll.u32 %s3, 4
      %s46 = int_to_ptr.hbm [resolvable:$true] %s45
      %s47 = sshll.u32 [#allocation7], 4
      %s48 = int_to_ptr.vmem [resolvable:$true] %s47
      %53 = dma.hbm_to_vmem [thread:$0]  %s46, 1024, %s48, [#allocation6], 64, 64, 4
    $region17: #{tpu_custom_call.1} parent=1 // pred_fallthru
      _
    // Predicated region
    $region18: #{tpu_custom_call.1} parent=1 // pred_check
      _
    $region19: #{tpu_custom_call.1} parent=1 // pred_check_branch
      %55 = sbr.rel (0) target = $region21
    $region20: #{tpu_custom_call.1} parent=1 // pred_region
      _
    $region21: #{tpu_custom_call.1} parent=1 // pred_fallthru
      _
    // Predicated region
    $region22: #{tpu_custom_call.1} parent=1 // pred_check
      _
    $region23: #{tpu_custom_call.1} parent=1 // pred_check_branch
      %57 = sbr.rel (0) target = $region25
    $region24: #{tpu_custom_call.1} parent=1 // pred_region
      %59 = vsyncadd [#allocation9], 0
      %s61 = sshll.u32 %s5, 4
      %s62 = int_to_ptr.hbm [resolvable:$true] %s61
      %s63 = sshll.u32 [#allocation8], 4
      %s64 = int_to_ptr.vmem [resolvable:$true] %s63
      %66 = dma.hbm_to_vmem [thread:$0]  %s62, 128, %s64, [#allocation9]
    $region25: #{tpu_custom_call.1} parent=1 // pred_fallthru
      _
    // Predicated region
    $region26: #{tpu_custom_call.1} parent=1 // pred_check
      _
    $region27: #{tpu_custom_call.1} parent=1 // pred_check_branch
      %68 = sbr.rel (0) target = $region29
    $region28: #{tpu_custom_call.1} parent=1 // pred_region
      %70 = dma.done [#allocation3], 64
    $region29: #{tpu_custom_call.1} parent=1 // pred_fallthru
      _
    // Predicated region
    $region30: #{tpu_custom_call.1} parent=1 // pred_check
      _
    $region31: #{tpu_custom_call.1} parent=1 // pred_check_branch
      %72 = sbr.rel (0) target = $region33
    $region32: #{tpu_custom_call.1} parent=1 // pred_region
      %74 = dma.done [#allocation6], 1024
    $region33: #{tpu_custom_call.1} parent=1 // pred_fallthru
      _
    // Predicated region
    $region34: #{tpu_custom_call.1} parent=1 // pred_check
      _
    $region35: #{tpu_custom_call.1} parent=1 // pred_check_branch
      %76 = sbr.rel (0) target = $region37
    $region36: #{tpu_custom_call.1} parent=1 // pred_region
      %78 = dma.done [#allocation6], 1024
    $region37: #{tpu_custom_call.1} parent=1 // pred_fallthru
      _
    // Predicated region
    $region38: #{tpu_custom_call.1} parent=1 // pred_check
      _
    $region39: #{tpu_custom_call.1} parent=1 // pred_check_branch
      %80 = sbr.rel (0) target = $region41
    $region40: #{tpu_custom_call.1} parent=1 // pred_region
      %82 = dma.done [#allocation9], 128
    $region41: #{tpu_custom_call.1} parent=1 // pred_fallthru
      _
    %v83 = vld [vmem:[#allocation2] sm:$0xf]
    %v84 = vld [vmem:[#allocation5] sm:$0xf]
    %v85 = vld [vmem:[#allocation5 + $0x4] sm:$0xf]
    %v86 = vld [vmem:[#allocation5 + $0x8] sm:$0xf]
    %v87 = vld [vmem:[#allocation5 + $0xc] sm:$0xf]
    %v88 = vld [vmem:[#allocation5 + $0x10] sm:$0xf]
    %v89 = vld [vmem:[#allocation5 + $0x14] sm:$0xf]
    %v90 = vld [vmem:[#allocation5 + $0x18] sm:$0xf]
    %v91 = vld [vmem:[#allocation5 + $0x1c] sm:$0xf]
    %v92 = vld [vmem:[#allocation5 + $0x20] sm:$0xf]
    %v93 = vld [vmem:[#allocation5 + $0x24] sm:$0xf]
    %v94 = vld [vmem:[#allocation5 + $0x28] sm:$0xf]
    %v95 = vld [vmem:[#allocation5 + $0x2c] sm:$0xf]
    %v96 = vld [vmem:[#allocation5 + $0x30] sm:$0xf]
    %v97 = vld [vmem:[#allocation5 + $0x34] sm:$0xf]
    %v98 = vld [vmem:[#allocation5 + $0x38] sm:$0xf]
    %v99 = vld [vmem:[#allocation5 + $0x3c] sm:$0xf]
    %v100 = vld [vmem:[%s2] sm:$0x1]
    %v102 = vperm.slane %v100, 0
    %v120 = vunpack.c.l.b16 %v84
    %v121 = vunpack.c.l.b16 %v85
    %v122 = vunpack.c.l.b16 %v86
    %v123 = vunpack.c.l.b16 %v87
    %v124 = vunpack.c.l.b16 %v88
    %v125 = vunpack.c.l.b16 %v89
    %v126 = vunpack.c.l.b16 %v90
    %v127 = vunpack.c.l.b16 %v91
    %v128 = vunpack.c.l.b16 %v92
    %v129 = vunpack.c.l.b16 %v93
    %v130 = vunpack.c.l.b16 %v94
    %v131 = vunpack.c.l.b16 %v95
    %v132 = vunpack.c.l.b16 %v96
    %v133 = vunpack.c.l.b16 %v97
    %v134 = vunpack.c.l.b16 %v98
    %v135 = vunpack.c.l.b16 %v99
    %v136 = vpack.c.b16 %v121, %v120
    %v137 = vpack.c.b16 %v123, %v122
    %v138 = vpack.c.b16 %v125, %v124
    %v139 = vpack.c.b16 %v127, %v126
    %v140 = vpack.c.b16 %v129, %v128
    %v141 = vpack.c.b16 %v131, %v130
    %v142 = vpack.c.b16 %v133, %v132
    %v143 = vpack.c.b16 %v135, %v134
    %152 = vmatpush.bf16.msra.mxu0 %v143
    %153 = vmatpush.bf16.msra.mxu0 %v142
    %154 = vmatpush.bf16.msra.mxu0 %v141
    %155 = vmatpush.bf16.msra.mxu0 %v140
    %156 = vmatpush.bf16.msra.mxu0 %v139
    %157 = vmatpush.bf16.msra.mxu0 %v138
    %158 = vmatpush.bf16.msra.mxu0 %v137
    %159 = vmatpush.bf16.msra.mxu0 %v136
    %160 = vmatmul.bf16.gmra.mxu0 %v83
    %v161 = vpop.f32.mrf.mxu0
    %v162 = vadd.f32 %v102, %v161
    %v163 = vpop.f32.mrf.mxu0
    %164 = vdwg.mxu0
    %v165 = vmax.f32 %v162, 0.0
    %v166 = vld [vmem:[#allocation8] sm:$0xff]
    %v167 = vmul.f32 %v165, %v166
    %v168 = vpack.c.bf16 %v167, %v167
    %v169 = vld [vmem:[#allocation7] sm:$0xf]
    %v170 = vld [vmem:[#allocation7 + $0x4] sm:$0xf]
    %v171 = vld [vmem:[#allocation7 + $0x8] sm:$0xf]
    %v172 = vld [vmem:[#allocation7 + $0xc] sm:$0xf]
    %v173 = vld [vmem:[#allocation7 + $0x10] sm:$0xf]
    %v174 = vld [vmem:[#allocation7 + $0x14] sm:$0xf]
    %v175 = vld [vmem:[#allocation7 + $0x18] sm:$0xf]
    %v176 = vld [vmem:[#allocation7 + $0x1c] sm:$0xf]
    %v177 = vld [vmem:[#allocation7 + $0x20] sm:$0xf]
    %v178 = vld [vmem:[#allocation7 + $0x24] sm:$0xf]
    %v179 = vld [vmem:[#allocation7 + $0x28] sm:$0xf]
    %v180 = vld [vmem:[#allocation7 + $0x2c] sm:$0xf]
    %v181 = vld [vmem:[#allocation7 + $0x30] sm:$0xf]
    %v182 = vld [vmem:[#allocation7 + $0x34] sm:$0xf]
    %v183 = vld [vmem:[#allocation7 + $0x38] sm:$0xf]
    %v184 = vld [vmem:[#allocation7 + $0x3c] sm:$0xf]
    %v185 = vld [vmem:[%s4] sm:$0x1]
    %v187 = vperm.slane %v185, 0
    %v205 = vunpack.c.l.b16 %v169
    %v206 = vunpack.c.l.b16 %v170
    %v207 = vunpack.c.l.b16 %v171
    %v208 = vunpack.c.l.b16 %v172
    %v209 = vunpack.c.l.b16 %v173
    %v210 = vunpack.c.l.b16 %v174
    %v211 = vunpack.c.l.b16 %v175
    %v212 = vunpack.c.l.b16 %v176
    %v213 = vunpack.c.l.b16 %v177
    %v214 = vunpack.c.l.b16 %v178
    %v215 = vunpack.c.l.b16 %v179
    %v216 = vunpack.c.l.b16 %v180
    %v217 = vunpack.c.l.b16 %v181
    %v218 = vunpack.c.l.b16 %v182
    %v219 = vunpack.c.l.b16 %v183
    %v220 = vunpack.c.l.b16 %v184
    %v221 = vpack.c.b16 %v206, %v205
    %v222 = vpack.c.b16 %v208, %v207
    %v223 = vpack.c.b16 %v210, %v209
    %v224 = vpack.c.b16 %v212, %v211
    %v225 = vpack.c.b16 %v214, %v213
    %v226 = vpack.c.b16 %v216, %v215
    %v227 = vpack.c.b16 %v218, %v217
    %v228 = vpack.c.b16 %v220, %v219
    %237 = vmatpush.bf16.msra.mxu0 %v228
    %238 = vmatpush.bf16.msra.mxu0 %v227
    %239 = vmatpush.bf16.msra.mxu0 %v226
    %240 = vmatpush.bf16.msra.mxu0 %v225
    %241 = vmatpush.bf16.msra.mxu0 %v224
    %242 = vmatpush.bf16.msra.mxu0 %v223
    %243 = vmatpush.bf16.msra.mxu0 %v222
    %244 = vmatpush.bf16.msra.mxu0 %v221
    %245 = vmatmul.bf16.gmra.mxu0 %v168
    %v246 = vpop.f32.mrf.mxu0
    %v247 = vadd.f32 %v187, %v246
    %v248 = vpop.f32.mrf.mxu0
    %249 = vdwg.mxu0
    %250 = vst [vmem:[#allocation10] sm:$0xff] %v247
    // Predicated region
    $region42: #{tpu_custom_call.1} parent=1 // pred_check
      _
    $region43: #{tpu_custom_call.1} parent=1 // pred_check_branch
      %252 = sbr.rel (0) target = $region45
    $region44: #{tpu_custom_call.1} parent=1 // pred_region
      %254 = vsyncadd [#allocation4], 0
      %s256 = sshll.u32 [#allocation10], 4
      %s257 = int_to_ptr.vmem [resolvable:$true] %s256
      %s258 = sshll.u32 %s6, 4
      %s259 = int_to_ptr.hbm [resolvable:$true] %s258
      %261 = dma.vmem_to_hbm [thread:$0]  %s257, 128, %s259, [#allocation4]
    $region45: #{tpu_custom_call.1} parent=1 // pred_fallthru
      _
    // Predicated region
    $region46: #{tpu_custom_call.1} parent=1 // pred_check
      _
    $region47: #{tpu_custom_call.1} parent=1 // pred_check_branch
      %263 = sbr.rel (0) target = $region49
    $region48: #{tpu_custom_call.1} parent=1 // pred_region
      %265 = dma.done [#allocation4], 128
    $region49: #{tpu_custom_call.1} parent=1 // pred_fallthru
      _
    %266 = vsyncpa [#allocation3], 1
    %267 = vsyncpa [#allocation6], 1
    %268 = vsyncpa [#allocation9], 1
    %269 = vsyncpa [#allocation4], 1

</llo_original>
